<compile_context>
chip_gen: v7x
topology: tpu7x:2x2x1
jax: 0.10.0
libtpu: 0.0.40
codegen_flags: <defaults>
</compile_context>

<pallas_src>
import functools

import jax
import jax.numpy as jnp
from jax.experimental import pallas as pl
from jax.experimental.pallas import tpu as pltpu


def _scale_kernel(x_ref, o_ref):
    # Elementwise: cast to f32 and multiply by the precomputed reciprocal of 255.
    # A constant multiply is a single VPU op per vreg; a divide would lower to
    # reciprocal + Newton refinement (EUP + extra VALU work).
    o_ref[...] = (x_ref[...].astype(jnp.float32) * (1.0 / 255.0)).astype(o_ref.dtype)


def _choose_block_rows(rows, lanes, target_block_elems, block_rows):
    """Pick a 32-aligned row-tile size (uint8 native sublane tiling is (32, 128))."""
    if block_rows is not None:
        br = int(block_rows)
    else:
        br = max(target_block_elems // lanes, 32)
        # Keep >= 4 grid steps when there is room: overlaps in/out DMA and lets the
        # "parallel" grid axis shard across v7x's 2 TensorCores (>= 2 steps per TC).
        four_step = (rows // 4 // 32) * 32
        if four_step >= 32:
            br = min(br, four_step)
    if br >= rows:
        return rows                       # single full-extent block: always legal
    br = max((br // 32) * 32, 32)         # 32-row alignment for uint8 tiles
    if br >= rows:
        return rows
    return br


def _normalize_2d(x2d, *, out_dtype, target_block_elems, block_rows, vmem_limit_bytes):
    """Tiled cast+scale over a lane-dense 2-D (rows, 128) view of the image bytes."""
    rows, lanes = x2d.shape
    br = _choose_block_rows(rows, lanes, target_block_elems, block_rows)
    grid = (pl.cdiv(rows, br),)
    return pl.pallas_call(
        _scale_kernel,
        out_shape=jax.ShapeDtypeStruct((rows, lanes), out_dtype),
        grid=grid,
        in_specs=[pl.BlockSpec((br, lanes), lambda i: (i, 0))],
        out_specs=pl.BlockSpec((br, lanes), lambda i: (i, 0)),
        compiler_params=pltpu.CompilerParams(
            # Fine-grained independent steps: shards across TensorCores on v7x megacore.
            dimension_semantics=("parallel",),
            # Explicit limit so the larger (~20 MiB double-buffered) tiles are not
            # clipped by the 16/32 MiB default scoped VMEM; fits all generations.
            vmem_limit_bytes=vmem_limit_bytes,
        ),
    )(x2d)


@functools.partial(
    jax.jit,
    static_argnames=("grayscale", "out_dtype", "min_pallas_bytes",
                     "target_block_elems", "block_rows", "vmem_limit_bytes"),
)
def _preprocess_impl(image, *, grayscale, out_dtype, min_pallas_bytes,
                     target_block_elems, block_rows, vmem_limit_bytes):
    # Layout glue. Cast and permute commute, so the permute/slice runs on the 1-byte
    # source and the heavy f32 writeback stays inside the tiled Pallas kernel.
    if grayscale:
        chw = image[None] if image.ndim == 2 else image[:, :, 0][None]
    else:
        chw = jnp.transpose(image, (2, 0, 1))   # HWC -> CHW on source dtype (uint8)
    # NOTE: resize branch is commented out in the torch source (doesn't torch.jit-compile),
    # so it is intentionally not reproduced here.

    size = chw.size
    nbytes = size * chw.dtype.itemsize
    if nbytes <= min_pallas_bytes:
        # Tiny input: ~0.35us per grid step + launch overhead dominates; one fused XLA
        # pass (cast * const) beats any Pallas grid at this size.
        return (chw.astype(jnp.float32) * (1.0 / 255.0)).astype(out_dtype)

    # Lane-dense view: 128-lane last axis -> unmasked, full-width vector stores.
    # Non-multiple-of-128 sizes are padded (one cheap 1-byte copy) instead of
    # emitting narrow-lane blocks (masked vst.msk partial stores).
    flat = chw.reshape(-1)
    pad = (-size) % 128
    if pad:
        flat = jnp.pad(flat, (0, pad))
    x2d = flat.reshape(-1, 128)

    y2d = _normalize_2d(x2d, out_dtype=out_dtype,
                        target_block_elems=target_block_elems,
                        block_rows=block_rows,
                        vmem_limit_bytes=vmem_limit_bytes)
    y = y2d.reshape(-1)
    if pad:
        y = y[:size]
    return y.reshape(chw.shape)


class PretrainedModelPallas:
    """JAX/Pallas port of PretrainedModel's preprocessing pipeline."""

    def __init__(self, preprocess_conf=None, *, out_dtype=jnp.float32,
                 min_pallas_bytes=256 * 1024, target_block_elems=1 << 21,
                 block_rows=None, vmem_limit_bytes=40 << 20):
        # conf['preprocessing'] in the original; ints only, e.g. {'grayscale': 0}
        self.preprocess_conf = {k: int(v) for k, v in (preprocess_conf or {}).items()}
        # out_dtype=jnp.bfloat16 is the fast path (halves the dominant f32 writeback
        # traffic) if the downstream backbone consumes bf16; default stays f32 to
        # match the torch reference.
        self.out_dtype = out_dtype
        self.min_pallas_bytes = min_pallas_bytes
        self.target_block_elems = target_block_elems
        self.block_rows = block_rows
        self.vmem_limit_bytes = vmem_limit_bytes

    def preprocess(self, image):
        return _preprocess_impl(
            image,
            grayscale=bool(self.preprocess_conf.get('grayscale', 0)),
            out_dtype=self.out_dtype,
            min_pallas_bytes=self.min_pallas_bytes,
            target_block_elems=self.target_block_elems,
            block_rows=self.block_rows,
            vmem_limit_bytes=self.vmem_limit_bytes,
        )

    def forward(self, inputs):
        # TODO(synk): self.model comes from base_model.dynamic_load(conf); no concrete
        # architecture exists in this module, so there is nothing to lower to Pallas.
        raise NotImplementedError(
            "dynamically-loaded backbone has no defined architecture to lower")


if __name__ == "__main__":
    key = jax.random.PRNGKey(0)

    # --- Color path through the Pallas kernel (multi-step pipelined grid) ---
    H, W, C = 64, 128, 3
    image = jax.random.randint(key, (H, W, C), 0, 256, dtype=jnp.int32).astype(jnp.uint8)
    model = PretrainedModelPallas(preprocess_conf={'grayscale': 0},
                                  min_pallas_bytes=0, block_rows=64)
    out = jax.block_until_ready(model.preprocess(image))
    ref = jnp.transpose(image.astype(jnp.float32), (2, 0, 1)) / 255.0
    assert out.shape == (C, H, W) and out.dtype == jnp.float32
    assert jnp.allclose(out, ref, atol=1e-6), "color preprocess mismatch"

    # --- Auto block sizing (4-step clamp keeps the grid pipelined / megacore-split) ---
    H2, W2 = 256, 128
    image2 = jax.random.randint(jax.random.PRNGKey(3), (H2, W2, C), 0, 256,
                                dtype=jnp.int32).astype(jnp.uint8)
    out2 = jax.block_until_ready(
        PretrainedModelPallas({'grayscale': 0}, min_pallas_bytes=0).preprocess(image2))
    ref2 = jnp.transpose(image2.astype(jnp.float32), (2, 0, 1)) / 255.0
    assert jnp.allclose(out2, ref2, atol=1e-6), "auto-block preprocess mismatch"

    # --- Grayscale path (channel-0 slice) through the Pallas kernel ---
    model_g = PretrainedModelPallas(preprocess_conf={'grayscale': 1}, min_pallas_bytes=0)
    out_g = jax.block_until_ready(model_g.preprocess(image))
    ref_g = image[:, :, 0][None].astype(jnp.float32) / 255.0
    assert out_g.shape == (1, H, W)
    assert jnp.allclose(out_g, ref_g, atol=1e-6), "grayscale preprocess mismatch"

    # --- Non-128-multiple size: padded to a lane-dense view, sliced after the kernel ---
    image_odd = jax.random.randint(jax.random.PRNGKey(1), (15, 17, 3), 0, 256,
                                   dtype=jnp.int32).astype(jnp.uint8)
    out_odd = jax.block_until_ready(
        PretrainedModelPallas({'grayscale': 0}, min_pallas_bytes=0).preprocess(image_odd))
    ref_odd = jnp.transpose(image_odd.astype(jnp.float32), (2, 0, 1)) / 255.0
    assert out_odd.shape == (3, 15, 17)
    assert jnp.allclose(out_odd, ref_odd, atol=1e-6), "odd-shape preprocess mismatch"

    # --- Tiny input: default size-based dispatch bypasses Pallas (fused XLA op) ---
    small = jax.random.randint(jax.random.PRNGKey(2), (16, 16, 3), 0, 256,
                               dtype=jnp.int32).astype(jnp.uint8)
    out_s = jax.block_until_ready(
        PretrainedModelPallas({'grayscale': 0}).preprocess(small))
    ref_s = jnp.transpose(small.astype(jnp.float32), (2, 0, 1)) / 255.0
    assert jnp.allclose(out_s, ref_s, atol=1e-6), "small-image preprocess mismatch"

    # --- bf16 fast-path output dtype (halves writeback traffic for bf16 backbones) ---
    out_bf = jax.block_until_ready(
        PretrainedModelPallas({'grayscale': 0}, out_dtype=jnp.bfloat16,
                              min_pallas_bytes=0).preprocess(image))
    assert out_bf.dtype == jnp.bfloat16
    assert jnp.allclose(out_bf.astype(jnp.float32), ref, atol=4e-3), "bf16 path mismatch"

    print("KERNEL_OK")
</pallas_src>

<mosaic_0001>
module attributes {stable_mosaic.version = 11 : i64} {
  func.func @_scale_kernel(%arg0: i32, %arg1: memref<64x128xi8, #tpu.memory_space<vmem>>, %arg2: memref<64x128xf32, #tpu.memory_space<vmem>>) attributes {dimension_semantics = [#tpu.dimension_semantics<parallel>], iteration_bounds = array<i64: 3>, scalar_prefetch = 0 : i64, scratch_operands = 0 : i64, tpu.core_type = #tpu.core_type<tc>, window_params = [{transform_indices = @transform_0, window_bounds = array<i64: 64, 128>}, {transform_indices = @transform_1, window_bounds = array<i64: 64, 128>}]} {
    %c0 = arith.constant 0 : index
    %c0_0 = arith.constant 0 : index
    %0 = vector.load %arg1[%c0, %c0_0] : memref<64x128xi8, #tpu.memory_space<vmem>>, vector<64x128xi8>
    %1 = arith.uitofp %0 : vector<64x128xi8> to vector<64x128xf32>
    %cst = arith.constant 0.00392156886 : f32
    %2 = vector.broadcast %cst : f32 to vector<64x128xf32>
    %3 = arith.mulf %1, %2 : vector<64x128xf32>
    %c0_1 = arith.constant 0 : index
    %c0_2 = arith.constant 0 : index
    %4 = vector.load %arg2[%c0_1, %c0_2] : memref<64x128xf32, #tpu.memory_space<vmem>>, vector<64x128xf32>
    tpu.vector_store %arg2[%c0_1, %c0_2], %3 {strides = array<i32>} : memref<64x128xf32, #tpu.memory_space<vmem>>, vector<64x128xf32>,
    return
  }
  func.func @transform_0(%arg0: i32) -> (i32, i32) {
    %c0_i32 = arith.constant 0 : i32
    %c0_i32_0 = arith.constant 0 : i32
    return %arg0, %c0_i32 : i32, i32
  }
  func.func @transform_1(%arg0: i32) -> (i32, i32) {
    %c0_i32 = arith.constant 0 : i32
    %c0_i32_0 = arith.constant 0 : i32
    return %arg0, %c0_i32 : i32, i32
  }
}

</mosaic_0001>

<llo_original>
// kernel: _preprocess_impl.1
$region0: #{_preprocess_impl.1}
  #allocation0 [shape = 'u32[]', space=smem, size = 0x4, offset = 0x4, fixed_abs, tag = 'smem constant byte address 0x4 - core index']
  #allocation1 [shape = 'u32[144,128]{1,0:T(1,128)}', space=vmem, size = 0x12000, scoped, tag = 'internal scratch']
  %s0 = inlined_call_operand.hbm [shape: u8[192,128], index: 0, kind: input, shape index: {}]
  %s1 = inlined_call_operand.hbm [shape: f32[192,128], index: 1, kind: output, shape index: {}]
  %s2 = sld [smem:[#allocation0]]
  $region41: #{_preprocess_impl.1} parent=0
    _
  %s4 = ssub.s32 1, %s2
  %s5 = scalar_select 0, %s4, %s2
  $region1: #{_preprocess_impl.1} parent=0
    #allocation2 [shape = 'u8[16384]{0}', space=vmem, size = 0x4000, scoped, tag = 'input window, operand 0']
    #allocation3 [shape = 's32[2]{0}', space=sflag, size = 0x8, scoped, tag = 'scoped memory for _preprocess_impl.1']
    #allocation4 [shape = 's32[2]{0}', space=sflag, size = 0x8, scoped, tag = 'scoped memory for _preprocess_impl.1']
    #allocation5 [shape = 'u8[65536]{0}', space=vmem, size = 0x10000, scoped, tag = 'output window, operand 0']
    %6 = vsyncpa [#allocation3], 0
    %s7 = scalar_lea.sflag [#allocation3], 1
    %8 = vsyncpa %s7, 0
    %9 = vsyncpa [#allocation4], 0
    %s10 = scalar_lea.sflag [#allocation4], 1
    %11 = vsyncpa %s10, 0
    loop: start=0, step=1, limit=5
    $region2: #{_preprocess_impl.1} parent=1 // loop_pre_header
      _
    $region3: #{_preprocess_impl.1} parent=1 // loop_header
      %s13 = sphi 0, %s17
      %p14 = scmp.ge.s32.totalorder %s13, 5
      %s23 = sphi 0, %s25
      %s26 = sphi 0, %s23
      %s27 = sphi 0, %s26
      %s43 = sphi 0, %s27
      %s49 = sphi 0, %s51
      %s52 = sphi 0, %s49
      %s53 = sphi 0, %s52
      %s69 = sphi 0, %s53
    $region4: #{_preprocess_impl.1} parent=1 // loop_header_branch
      %16 = sbr.rel (%p14) target = $region8
    $region5: #{_preprocess_impl.1} parent=1 // loop_body
      %s18 = ssub.s32 %s13, 1
      %s19 = ssub.s32 %s13, 2
      %s20 = sadd.s32 %s13, 1
      %s21 = ssub.s32 %s13, %s20
      %p22 = scmp.eq.s32.totalorder %s21, 0
      %s24 = sadd.s32 %s23, 1
      %s25 = scalar_select %p22, %s23, %s24
      %p28 = pneg %p22
      %p29 = scmp.eq.s32.totalorder %s13, 2
      %p30 = por %p28, %p29
      %p31 = scmp.ne.s32.totalorder %s23, %s26
      %p32 = scmp.eq.s32.totalorder %s13, 0
      %p33 = por %p31, %p32
      %p34 = scmp.ne.s32.totalorder %s23, %s26
      %p35 = scmp.eq.s32.totalorder %s18, 2
      %p36 = por %p34, %p35
      %p37 = scmp.ne.s32.totalorder %s26, %s27
      %p38 = scmp.eq.s32.totalorder %s18, 0
      %p39 = por %p37, %p38
      %p40 = scmp.ne.s32.totalorder %s26, %s27
      %p41 = scmp.eq.s32.totalorder %s19, 2
      %p42 = por %p40, %p41
      %p44 = scmp.ne.s32.totalorder %s27, %s43
      %p45 = scmp.eq.s32.totalorder %s19, 0
      %p46 = por %p44, %p45
      %s47 = ssub.s32 %s13, %s20
      %p48 = scmp.eq.s32.totalorder %s47, 0
      %s50 = sadd.s32 %s49, 1
      %s51 = scalar_select %p48, %s49, %s50
      %p54 = pneg %p48
      %p55 = scmp.eq.s32.totalorder %s13, 2
      %p56 = por %p54, %p55
      %p57 = scmp.ne.s32.totalorder %s49, %s52
      %p58 = scmp.eq.s32.totalorder %s13, 0
      %p59 = por %p57, %p58
      %p60 = scmp.ne.s32.totalorder %s49, %s52
      %p61 = scmp.eq.s32.totalorder %s18, 2
      %p62 = por %p60, %p61
      %p63 = scmp.ne.s32.totalorder %s52, %s53
      %p64 = scmp.eq.s32.totalorder %s18, 0
      %p65 = por %p63, %p64
      %p66 = scmp.ne.s32.totalorder %s52, %s53
      %p67 = scmp.eq.s32.totalorder %s19, 2
      %p68 = por %p66, %p67
      %p70 = scmp.ne.s32.totalorder %s53, %s69
      %p71 = scmp.eq.s32.totalorder %s19, 0
      %p72 = por %p70, %p71
      %p73 = scmp.le.s32.totalorder 1, %s13
      %p74 = scmp.lt.s32.totalorder %s13, 4
      %p75 = pnand %p73, %p74
      %p76 = pneg %p75
      // Predicated region
      $region9: #{_preprocess_impl.1} parent=5 // pred_check
        _
      $region10: #{_preprocess_impl.1} parent=5 // pred_check_branch
        %78 = sbr.rel (%p75) target = $region12
      $region11: #{_preprocess_impl.1} parent=5 // pred_region
        %s79 = ssub.s32 %s13, 1
      $region12: #{_preprocess_impl.1} parent=5 // pred_fallthru
        _
      %p80 = scmp.lt.s32.totalorder %s13, 3
      // Predicated region
      $region13: #{_preprocess_impl.1} parent=5 // pred_check
        %p81 = pneg %p80
      $region14: #{_preprocess_impl.1} parent=5 // pred_check_branch
        %83 = sbr.rel (%p81) target = $region16
      $region15: #{_preprocess_impl.1} parent=5 // pred_region
        // Predicated region
        $region17: #{_preprocess_impl.1} parent=15 // pred_check
          %p84 = pneg %p33
        $region18: #{_preprocess_impl.1} parent=15 // pred_check_branch
          %86 = sbr.rel (%p84) target = $region20
        $region19: #{_preprocess_impl.1} parent=15 // pred_region
          %s87 = sand.u32 %s23, 1
          %s88 = scalar_lea.sflag [#allocation3], %s87
          %s89 = sand.u32 %s23, 1
          %s90 = smul.addr %s89, 16
          %s91 = scalar_lea.vmem [#allocation2], %s90
          %s92 = smul.u32 2, %s13
          %s94 = ssub.s32 256, 256
          %95 = vsyncadd %s88, %s94
          %s96 = smul.addr %s92, 128
          %s97 = scalar_lea.hbm %s0, %s96
          %s98 = sshll.u32 %s91, 4
          %s99 = int_to_ptr.vmem [resolvable:$true] %s98
          %104 = dma.hbm_to_vmem [thread:$0]  %s97, 256, %s99, %s88, 128, 128, 8
        $region20: #{_preprocess_impl.1} parent=15 // pred_fallthru
          _
      $region16: #{_preprocess_impl.1} parent=5 // pred_fallthru
        _
      %p105 = scmp.le.s32.totalorder 1, %s13
      %p106 = scmp.lt.s32.totalorder %s13, 4
      %p107 = pnand %p105, %p106
      %p108 = pneg %p107
      // Predicated region
      $region21: #{_preprocess_impl.1} parent=5 // pred_check
        _
      $region22: #{_preprocess_impl.1} parent=5 // pred_check_branch
        %110 = sbr.rel (%p107) target = $region24
      $region23: #{_preprocess_impl.1} parent=5 // pred_region
        %s111 = ssub.s32 %s13, 1
        %s112 = sand.u32 %s26, 1
        %s113 = scalar_lea.sflag [#allocation3], %s112
        %s114 = sand.u32 %s26, 1
        %s115 = smul.addr %s114, 16
        %s116 = scalar_lea.vmem [#allocation2], %s115
        // Predicated region
        $region25: #{_preprocess_impl.1} parent=23 // pred_check
          %p117 = pneg %p39
        $region26: #{_preprocess_impl.1} parent=23 // pred_check_branch
          %119 = sbr.rel (%p117) target = $region28
        $region27: #{_preprocess_impl.1} parent=23 // pred_region
          %120 = dma.done %s113, 256
        $region28: #{_preprocess_impl.1} parent=23 // pred_fallthru
          _
        %s121 = sand.u32 %s26, 1
        %s122 = scalar_lea.sflag [#allocation3], %s121
        %s123 = sand.u32 %s26, 1
        %s124 = smul.addr %s123, 16
        %s125 = scalar_lea.vmem [#allocation2], %s124
        %p126 = pneg %p39
        %p127 = pneg %p36
        %p128 = pneg %p65
        %p129 = pneg %p62
        %s130 = sand.u32 %s52, 1
        %s131 = scalar_lea.sflag [#allocation4], %s130
        %s132 = sand.u32 %s52, 1
        %s133 = smul.addr %s132, 64
        %s134 = scalar_lea.vmem [#allocation5], %s133
        %s135 = smul.u32 2, %s18
        %s136 = smul.u32 8, %s18
        %v137 = vld [vmem:[%s116] sm:$0xff]
        %v138 = vld [vmem:[%s116 + $0x8] sm:$0xff]
        %v139 = vunpack.c.0.s8 %v137
        %v140 = vunpack.c.1.s8 %v137
        %v141 = vunpack.c.2.s8 %v137
        %v142 = vunpack.c.3.s8 %v137
        %v143 = vunpack.c.0.s8 %v138
        %v144 = vunpack.c.1.s8 %v138
        %v145 = vunpack.c.2.s8 %v138
        %v146 = vunpack.c.3.s8 %v138
        %v147 = vand.u32 %v139, 255
        %v148 = vand.u32 %v140, 255
        %v149 = vand.u32 %v141, 255
        %v150 = vand.u32 %v142, 255
        %v151 = vand.u32 %v143, 255
        %v152 = vand.u32 %v144, 255
        %v153 = vand.u32 %v145, 255
        %v154 = vand.u32 %v146, 255
        %v155 = vcvt.s32.f32 %v147
        %v156 = vcvt.s32.f32 %v148
        %v157 = vcvt.s32.f32 %v149
        %v158 = vcvt.s32.f32 %v150
        %v159 = vcvt.s32.f32 %v151
        %v160 = vcvt.s32.f32 %v152
        %v161 = vcvt.s32.f32 %v153
        %v162 = vcvt.s32.f32 %v154
        %v163 = vmul.f32 %v155, 0.003921569
        %v164 = vmul.f32 %v156, 0.003921569
        %v165 = vmul.f32 %v157, 0.003921569
        %v166 = vmul.f32 %v158, 0.003921569
        %v167 = vmul.f32 %v159, 0.003921569
        %v168 = vmul.f32 %v160, 0.003921569
        %v169 = vmul.f32 %v161, 0.003921569
        %v170 = vmul.f32 %v162, 0.003921569
        %171 = vst [vmem:[%s134] sm:$0xff] %v163
        %172 = vst [vmem:[%s134 + $0x8] sm:$0xff] %v164
        %173 = vst [vmem:[%s134 + $0x10] sm:$0xff] %v165
        %174 = vst [vmem:[%s134 + $0x18] sm:$0xff] %v166
        %175 = vst [vmem:[%s134 + $0x20] sm:$0xff] %v167
        %176 = vst [vmem:[%s134 + $0x28] sm:$0xff] %v168
        %177 = vst [vmem:[%s134 + $0x30] sm:$0xff] %v169
        %178 = vst [vmem:[%s134 + $0x38] sm:$0xff] %v170
        %s179 = sand.u32 %s52, 1
        %s180 = scalar_lea.sflag [#allocation4], %s179
        %s181 = sand.u32 %s52, 1
        %s182 = smul.addr %s181, 64
        %s183 = scalar_lea.vmem [#allocation5], %s182
        // Predicated region
        $region29: #{_preprocess_impl.1} parent=23 // pred_check
          %p184 = pneg %p62
        $region30: #{_preprocess_impl.1} parent=23 // pred_check_branch
          %186 = sbr.rel (%p184) target = $region32
        $region31: #{_preprocess_impl.1} parent=23 // pred_region
          %s187 = smul.u32 8, %s18
          %s189 = ssub.s32 1024, 1024
          %190 = vsyncadd %s180, %s189
          %s191 = smul.addr %s187, 128
          %s192 = scalar_lea.hbm %s1, %s191
          %s193 = sshll.u32 %s183, 4
          %s194 = int_to_ptr.vmem [resolvable:$true] %s193
          %199 = dma.vmem_to_hbm [thread:$0]  %s194, 1024, %s192, %s180, 128, 128, 8
        $region32: #{_preprocess_impl.1} parent=23 // pred_fallthru
          _
      $region24: #{_preprocess_impl.1} parent=5 // pred_fallthru
        _
      %p200 = scmp.le.s32.totalorder 2, %s13
      // Predicated region
      $region33: #{_preprocess_impl.1} parent=5 // pred_check
        %p201 = pneg %p200
      $region34: #{_preprocess_impl.1} parent=5 // pred_check_branch
        %203 = sbr.rel (%p201) target = $region36
      $region35: #{_preprocess_impl.1} parent=5 // pred_region
        %s204 = ssub.s32 %s13, 2
        // Predicated region
        $region37: #{_preprocess_impl.1} parent=35 // pred_check
          %p205 = pneg %p68
        $region38: #{_preprocess_impl.1} parent=35 // pred_check_branch
          %207 = sbr.rel (%p205) target = $region40
        $region39: #{_preprocess_impl.1} parent=35 // pred_region
          %s208 = sand.u32 %s53, 1
          %s209 = scalar_lea.sflag [#allocation4], %s208
          %s210 = sand.u32 %s53, 1
          %s211 = smul.addr %s210, 64
          %s212 = scalar_lea.vmem [#allocation5], %s211
          %213 = dma.done %s209, 1024
        $region40: #{_preprocess_impl.1} parent=35 // pred_fallthru
          _
      $region36: #{_preprocess_impl.1} parent=5 // pred_fallthru
        _
    $region6: #{_preprocess_impl.1} parent=1 // loop_footer
      %s17 = sadd.s32 1, %s13
    $region7: #{_preprocess_impl.1} parent=1 // loop_footer_branch
      %12 = sbr.rel target = $region3
    $region8: #{_preprocess_impl.1} parent=1 // loop_exit
      _
    %214 = vsyncpa [#allocation3], 1
    %s215 = scalar_lea.sflag [#allocation3], 1
    %216 = vsyncpa %s215, 1
    %217 = vsyncpa [#allocation4], 1
    %s218 = scalar_lea.sflag [#allocation4], 1
    %219 = vsyncpa %s218, 1

</llo_original>
